<compile_context>
chip_gen: v5e
topology: v5e:2x2
jax: 0.10.0
libtpu: 0.0.40
codegen_flags: <defaults>
</compile_context>

<pallas_src>
import warnings

import numpy as np
import jax
import jax.numpy as jnp
from jax.experimental import pallas as pl
from jax.experimental.pallas import tpu as pltpu

LN_EPS = 1e-5
_SQRT_2_OVER_PI = 0.7978845608028654


def _gelu_tanh(u):
    # TODO(synk): PyTorch nn.GELU() defaults to the exact erf form; the tanh
    # approximation (max deviation ~1e-3) is used here and in the reference
    # because erf has no guaranteed Mosaic lowering.
    u2 = u * u
    return 0.5 * u * (1.0 + jnp.tanh(_SQRT_2_OVER_PI * u * (1.0 + 0.044715 * u2)))


def _round_up(a, b):
    return (a + b - 1) // b * b


def _cdiv(a, b):
    return (a + b - 1) // b


def _lane_group(C):
    """How many tokens are packed side-by-side so the lane dim becomes 128."""
    if C % 128 == 0:
        return 1                    # already lane dense
    if 128 % C == 0:
        return 128 // C             # fast path: P = 128
    return 1                        # slow fallback: sub-128 lane dim (warned)


# ----------------------------------------------------------------------------
# Kernel
# ----------------------------------------------------------------------------
def _block_kernel(x_ref, a_ref, dft_ref, w1_ref, w2_ref, lnp_ref, b1_ref, o_ref):
    f32, bf16 = jnp.float32, jnp.bfloat16
    dotf = lambda a, b: jnp.dot(a, b, preferred_element_type=f32)

    x = x_ref[...].astype(f32)          # (tm, P)   P = G*C, lane dense
    A = a_ref[...]                      # (P, P)    bf16 block-diag segment averaging
    DFT = dft_ref[...]                  # (P, P)    bf16 (I-A) diag(g1) cos_fold
    lnp = lnp_ref[...]                  # (8, P)    f32 stacked per-lane vectors
    gf, bff = lnp[0:1], lnp[1:2]
    g2, b2 = lnp[2:3], lnp[3:4]
    b2m, row1 = lnp[4:5], lnp[5:6]

    # ---- LN1 + Fourier (affine/centering folded into DFT/row1) --------------
    #   re = rsqrt(var1) * (x @ DFT) + row1     (already zero-mean over DFT axis)
    xb = x.astype(bf16)
    mu1 = dotf(xb, A)                                   # segment mean
    v1 = dotf((x * x).astype(bf16), A) - mu1 * mu1      # segment variance
    re = jax.lax.rsqrt(jnp.maximum(v1, 0.0) + LN_EPS) * dotf(xb, DFT) + row1
    vf = dotf((re * re).astype(bf16), A)                # lnf variance (mean folded out)
    attn = re * jax.lax.rsqrt(jnp.maximum(vf, 0.0) + LN_EPS) * gf + bff
    x1 = x + attn                                       # residual 1 (kept f32)

    # ---- LN2 -----------------------------------------------------------------
    x1b = x1.astype(bf16)
    mu2 = dotf(x1b, A)
    v2 = dotf((x1 * x1).astype(bf16), A) - mu2 * mu2
    h2 = (x1 - mu2) * jax.lax.rsqrt(jnp.maximum(v2, 0.0) + LN_EPS) * g2 + b2

    # ---- MLP (block-diagonal weights keep packed token groups independent) ---
    u = dotf(h2.astype(bf16), w1_ref[...]) + b1_ref[...]        # (tm, 4P)
    d = dotf(_gelu_tanh(u).astype(bf16), w2_ref[...]) + b2m
    o_ref[...] = (x1 + d).astype(o_ref.dtype)


# ----------------------------------------------------------------------------
# One-time parameter packing (call once per parameter set, reuse every forward)
# ----------------------------------------------------------------------------
def prepare_block_params(params, C):
    G = _lane_group(C)
    P = G * C
    if P % 128 != 0:
        # TODO(synk): sub-128 lane width -> masked partial stores / narrow MXU.
        warnings.warn(f"dim={C}: packed lane width {P} is not a multiple of 128; "
                      "the kernel runs on the slow masked-store path.")
    f64 = np.float64
    g1 = np.asarray(params["ln1_g"], f64); b1 = np.asarray(params["ln1_b"], f64)
    gf = np.asarray(params["lnf_g"], f64); bf = np.asarray(params["lnf_b"], f64)
    g2 = np.asarray(params["ln2_g"], f64); b2 = np.asarray(params["ln2_b"], f64)
    w1 = np.asarray(params["w1"], f64);    b1m = np.asarray(params["b1"], f64)
    w2 = np.asarray(params["w2"], f64);    b2m = np.asarray(params["b2"], f64)

    # Structural matrices: segment averaging + mean-folded real-DFT matrix with
    # the LN1 centering and gain folded in (all per C-wide segment).
    j = np.arange(C, dtype=np.int64)
    cosf = np.cos(2.0 * np.pi * ((np.outer(j, j) % C).astype(f64)) / C)
    cosf[0, :] -= 1.0                      # folds lnf mean removal (subtracts h[0])
    avg = np.full((C, C), 1.0 / C)
    dft_c = (np.eye(C) - avg) @ np.diag(g1) @ cosf     # LN1 center+gain folded in
    row1_c = b1 @ cosf                                 # LN1 bias contribution

    eye_g = np.eye(G)
    A = np.kron(eye_g, avg)                # (P, P)
    DFT = np.kron(eye_g, dft_c)            # (P, P)
    W1p = np.kron(eye_g, w1)               # (P, 4P) block-diagonal
    W2p = np.kron(eye_g, w2)               # (4P, P) block-diagonal
    b1p = np.tile(b1m, G).reshape(1, 4 * P)

    tile = lambda v: np.tile(v, G)
    lnp = np.stack([tile(gf), tile(bf), tile(g2), tile(b2),
                    tile(b2m), tile(row1_c),
                    np.zeros(P), np.zeros(P)])          # (8, P)

    bf16 = jnp.bfloat16
    return {
        "A":   jnp.asarray(A,   bf16),     # 1/C is exact in bf16 for power-of-two C
        "dft": jnp.asarray(DFT, bf16),
        "w1":  jnp.asarray(W1p, bf16),
        "w2":  jnp.asarray(W2p, bf16),
        "lnp": jnp.asarray(lnp, jnp.float32),
        "b1":  jnp.asarray(b1p, jnp.float32),
    }


# ----------------------------------------------------------------------------
# Forward wrapper
# ----------------------------------------------------------------------------
def block_forward(x, consts, *, tm_max=512):
    """Fused Block.forward.

    x:      (B, N, C) activations (float32 or bfloat16; output keeps the dtype).
    consts: output of prepare_block_params(params, C).
    tm_max: row-tile cap; 512 fits v5e's 16 MiB scoped-VMEM default, raise to
            1024 on v6e/v7x to amortize per-grid-step overhead.
    """
    B, N, C = x.shape
    G = _lane_group(C)
    P = G * C
    M = B * N

    x2d = x.reshape(M, C)
    rem = (-M) % G
    if rem:                       # rare: B*N not a multiple of the lane group
        x2d = jnp.pad(x2d, ((0, rem), (0, 0)))
    Mp = (M + rem) // G
    xp = x2d.reshape(Mp, P)       # zero-copy packing when rem == 0

    # Row tile: multiple of 8 sublanes; keep >= 4 grid steps when possible so
    # dimension_semantics=("parallel",) can shard across both v7x TensorCores.
    if Mp <= 8:
        tm = Mp                   # single block == full array (tiny inputs)
    else:
        tm = max(8, min(tm_max, _round_up(_cdiv(Mp, 4), 8)))
    grid = _cdiv(Mp, tm)          # ragged last tile handled by Pallas boundary

    const = lambda i: (0, 0)
    out_p = pl.pallas_call(
        _block_kernel,
        out_shape=jax.ShapeDtypeStruct((Mp, P), x.dtype),
        grid_spec=pltpu.PrefetchScalarGridSpec(
            num_scalar_prefetch=0,
            grid=(grid,),
            in_specs=[
                pl.BlockSpec((tm, P), lambda i: (i, 0)),    # packed activations
                pl.BlockSpec((P, P), const),                # segment averaging A
                pl.BlockSpec((P, P), const),                # folded DFT matrix
                pl.BlockSpec((P, 4 * P), const),            # MLP W1 (block-diag)
                pl.BlockSpec((4 * P, P), const),            # MLP W2 (block-diag)
                pl.BlockSpec((8, P), const),                # stacked per-lane rows
                pl.BlockSpec((1, 4 * P), const),            # MLP b1
            ],
            out_specs=pl.BlockSpec((tm, P), lambda i: (i, 0)),
        ),
        compiler_params=pltpu.CompilerParams(
            dimension_semantics=("parallel",),
        ),
    )(xp, consts["A"], consts["dft"], consts["w1"], consts["w2"],
      consts["lnp"], consts["b1"])

    out = out_p.reshape(Mp * G, C)
    if rem:
        out = out[:M]
    return out.reshape(B, N, C)


# ----------------------------------------------------------------------------
# Pure-JAX reference mirroring the PyTorch code path (eval, dropout=0)
# ----------------------------------------------------------------------------
def block_reference(x, params):
    B, N, C = x.shape

    def ln(v, g, b):
        m = v.mean(-1, keepdims=True)
        var = ((v - m) ** 2).mean(-1, keepdims=True)
        return (v - m) / jnp.sqrt(var + LN_EPS) * g + b

    def fourier(v):
        e = jnp.broadcast_to(v[:, :, None, :], (B, N, N, C))
        # ones(1,N,N,1).triu_(1) acts on the last two dims (N,1): empty strict
        # upper triangle -> the masked_fill_ is a no-op (kept for fidelity).
        out = jnp.fft.fft(e, axis=-1).real
        diag = out[:, jnp.arange(N), jnp.arange(N), :]
        return ln(diag, params["lnf_g"], params["lnf_b"])

    x1 = x + fourier(ln(x, params["ln1_g"], params["ln1_b"]))
    h2 = ln(x1, params["ln2_g"], params["ln2_b"])
    u = h2 @ params["w1"] + params["b1"]
    mlp = _gelu_tanh(u) @ params["w2"] + params["b2"]
    return x1 + mlp


if __name__ == "__main__":
    key = jax.random.PRNGKey(0)
    ks = jax.random.split(key, 13)

    C = 32
    params = {
        "ln1_g": 1.0 + 0.1 * jax.random.normal(ks[0], (C,), jnp.float32),
        "ln1_b": 0.1 * jax.random.normal(ks[1], (C,), jnp.float32),
        "lnf_g": 1.0 + 0.1 * jax.random.normal(ks[2], (C,), jnp.float32),
        "lnf_b": 0.1 * jax.random.normal(ks[3], (C,), jnp.float32),
        "ln2_g": 1.0 + 0.1 * jax.random.normal(ks[4], (C,), jnp.float32),
        "ln2_b": 0.1 * jax.random.normal(ks[5], (C,), jnp.float32),
        "w1": jax.random.normal(ks[6], (C, 4 * C), jnp.float32) / np.sqrt(C),
        "b1": 0.1 * jax.random.normal(ks[7], (4 * C,), jnp.float32),
        "w2": jax.random.normal(ks[8], (4 * C, C), jnp.float32) / np.sqrt(4 * C),
        "b2": 0.1 * jax.random.normal(ks[9], (C,), jnp.float32),
    }

    consts = prepare_block_params(params, C)        # packed once, reused below
    fwd = jax.jit(block_forward)

    # (B, N): single-tile, multi-step parallel grid, and a ragged-tail grid.
    cases = [(2, 8), (4, 128), (3, 40)]
    for idx, (B, N) in enumerate(cases):
        x = jax.random.normal(ks[10 + idx], (B, N, C), dtype=jnp.float32)
        y = jax.block_until_ready(fwd(x, consts))
        y_ref = block_reference(x, params)
        # bf16 MXU operands bound the error (~1e-3 relative per matmul, on top
        # of the tanh-GELU approx); f32 operands recover ~1e-3 agreement.
        np.testing.assert_allclose(np.asarray(y), np.asarray(y_ref),
                                   atol=2e-2, rtol=2e-2)

    print("KERNEL_OK")
</pallas_src>

<mosaic_0001>
module attributes {stable_mosaic.version = 11 : i64} {
  func.func @_block_kernel(%arg0: i32, %arg1: memref<4x128xf32, #tpu.memory_space<vmem>>, %arg2: memref<128x128xbf16, #tpu.memory_space<vmem>>, %arg3: memref<128x128xbf16, #tpu.memory_space<vmem>>, %arg4: memref<128x512xbf16, #tpu.memory_space<vmem>>, %arg5: memref<512x128xbf16, #tpu.memory_space<vmem>>, %arg6: memref<8x128xf32, #tpu.memory_space<vmem>>, %arg7: memref<1x512xf32, #tpu.memory_space<vmem>>, %arg8: memref<4x128xf32, #tpu.memory_space<vmem>>) attributes {dimension_semantics = [#tpu.dimension_semantics<parallel>], iteration_bounds = array<i64: 1>, scalar_prefetch = 0 : i64, scratch_operands = 0 : i64, tpu.core_type = #tpu.core_type<tc>, window_params = [{transform_indices = @transform_0, window_bounds = array<i64: 4, 128>}, {pipeline_mode = #tpu.pipeline_mode<synchronous>, transform_indices = @transform_1, window_bounds = array<i64: 128, 128>}, {pipeline_mode = #tpu.pipeline_mode<synchronous>, transform_indices = @transform_2, window_bounds = array<i64: 128, 128>}, {pipeline_mode = #tpu.pipeline_mode<synchronous>, transform_indices = @transform_3, window_bounds = array<i64: 128, 512>}, {pipeline_mode = #tpu.pipeline_mode<synchronous>, transform_indices = @transform_4, window_bounds = array<i64: 512, 128>}, {pipeline_mode = #tpu.pipeline_mode<synchronous>, transform_indices = @transform_5, window_bounds = array<i64: 8, 128>}, {pipeline_mode = #tpu.pipeline_mode<synchronous>, transform_indices = @transform_6, window_bounds = array<i64: 1, 512>}, {transform_indices = @transform_7, window_bounds = array<i64: 4, 128>}]} {
    %c0 = arith.constant 0 : index
    %c0_0 = arith.constant 0 : index
    %0 = vector.load %arg1[%c0, %c0_0] : memref<4x128xf32, #tpu.memory_space<vmem>>, vector<4x128xf32>
    %c0_1 = arith.constant 0 : index
    %c0_2 = arith.constant 0 : index
    %1 = vector.load %arg2[%c0_1, %c0_2] : memref<128x128xbf16, #tpu.memory_space<vmem>>, vector<128x128xbf16>
    %c0_3 = arith.constant 0 : index
    %c0_4 = arith.constant 0 : index
    %2 = vector.load %arg3[%c0_3, %c0_4] : memref<128x128xbf16, #tpu.memory_space<vmem>>, vector<128x128xbf16>
    %c0_5 = arith.constant 0 : index
    %c0_6 = arith.constant 0 : index
    %3 = vector.load %arg6[%c0_5, %c0_6] : memref<8x128xf32, #tpu.memory_space<vmem>>, vector<8x128xf32>
    %4 = vector.extract_strided_slice %3 {offsets = [0, 0], sizes = [1, 128], strides = [1, 1]} : vector<8x128xf32> to vector<1x128xf32>
    %5 = vector.extract_strided_slice %3 {offsets = [1, 0], sizes = [1, 128], strides = [1, 1]} : vector<8x128xf32> to vector<1x128xf32>
    %6 = vector.extract_strided_slice %3 {offsets = [2, 0], sizes = [1, 128], strides = [1, 1]} : vector<8x128xf32> to vector<1x128xf32>
    %7 = vector.extract_strided_slice %3 {offsets = [3, 0], sizes = [1, 128], strides = [1, 1]} : vector<8x128xf32> to vector<1x128xf32>
    %8 = vector.extract_strided_slice %3 {offsets = [4, 0], sizes = [1, 128], strides = [1, 1]} : vector<8x128xf32> to vector<1x128xf32>
    %9 = vector.extract_strided_slice %3 {offsets = [5, 0], sizes = [1, 128], strides = [1, 1]} : vector<8x128xf32> to vector<1x128xf32>
    %10 = arith.truncf %0 : vector<4x128xf32> to vector<4x128xbf16>
    %cst = arith.constant dense<0.000000e+00> : vector<4x128xf32>
    %11 = tpu.matmul %10, %1, %cst {dimension_numbers = #tpu.dot_dimension_numbers<[1], [0], [0], [1], [0, 0, 1, 1], [], []>} : vector<4x128xbf16>, vector<128x128xbf16>, vector<4x128xf32> -> vector<4x128xf32>
    %12 = arith.mulf %0, %0 : vector<4x128xf32>
    %13 = arith.truncf %12 : vector<4x128xf32> to vector<4x128xbf16>
    %cst_7 = arith.constant dense<0.000000e+00> : vector<4x128xf32>
    %14 = tpu.matmul %13, %1, %cst_7 {dimension_numbers = #tpu.dot_dimension_numbers<[1], [0], [0], [1], [0, 0, 1, 1], [], []>} : vector<4x128xbf16>, vector<128x128xbf16>, vector<4x128xf32> -> vector<4x128xf32>
    %15 = arith.mulf %11, %11 : vector<4x128xf32>
    %16 = arith.subf %14, %15 : vector<4x128xf32>
    %cst_8 = arith.constant 0.000000e+00 : f32
    %17 = vector.broadcast %cst_8 : f32 to vector<4x128xf32>
    %18 = arith.maximumf %16, %17 : vector<4x128xf32>
    %cst_9 = arith.constant 9.99999974E-6 : f32
    %19 = vector.broadcast %cst_9 : f32 to vector<4x128xf32>
    %20 = arith.addf %18, %19 : vector<4x128xf32>
    %21 = math.rsqrt %20 : vector<4x128xf32>
    %cst_10 = arith.constant dense<0.000000e+00> : vector<4x128xf32>
    %22 = tpu.matmul %10, %2, %cst_10 {dimension_numbers = #tpu.dot_dimension_numbers<[1], [0], [0], [1], [0, 0, 1, 1], [], []>} : vector<4x128xbf16>, vector<128x128xbf16>, vector<4x128xf32> -> vector<4x128xf32>
    %23 = arith.mulf %21, %22 : vector<4x128xf32>
    %24 = vector.broadcast %9 : vector<1x128xf32> to vector<4x128xf32>
    %25 = arith.addf %23, %24 : vector<4x128xf32>
    %26 = arith.mulf %25, %25 : vector<4x128xf32>
    %27 = arith.truncf %26 : vector<4x128xf32> to vector<4x128xbf16>
    %cst_11 = arith.constant dense<0.000000e+00> : vector<4x128xf32>
    %28 = tpu.matmul %27, %1, %cst_11 {dimension_numbers = #tpu.dot_dimension_numbers<[1], [0], [0], [1], [0, 0, 1, 1], [], []>} : vector<4x128xbf16>, vector<128x128xbf16>, vector<4x128xf32> -> vector<4x128xf32>
    %cst_12 = arith.constant 0.000000e+00 : f32
    %29 = vector.broadcast %cst_12 : f32 to vector<4x128xf32>
    %30 = arith.maximumf %28, %29 : vector<4x128xf32>
    %cst_13 = arith.constant 9.99999974E-6 : f32
    %31 = vector.broadcast %cst_13 : f32 to vector<4x128xf32>
    %32 = arith.addf %30, %31 : vector<4x128xf32>
    %33 = math.rsqrt %32 : vector<4x128xf32>
    %34 = arith.mulf %25, %33 : vector<4x128xf32>
    %35 = vector.broadcast %4 : vector<1x128xf32> to vector<4x128xf32>
    %36 = arith.mulf %34, %35 : vector<4x128xf32>
    %37 = vector.broadcast %5 : vector<1x128xf32> to vector<4x128xf32>
    %38 = arith.addf %36, %37 : vector<4x128xf32>
    %39 = arith.addf %0, %38 : vector<4x128xf32>
    %40 = arith.truncf %39 : vector<4x128xf32> to vector<4x128xbf16>
    %cst_14 = arith.constant dense<0.000000e+00> : vector<4x128xf32>
    %41 = tpu.matmul %40, %1, %cst_14 {dimension_numbers = #tpu.dot_dimension_numbers<[1], [0], [0], [1], [0, 0, 1, 1], [], []>} : vector<4x128xbf16>, vector<128x128xbf16>, vector<4x128xf32> -> vector<4x128xf32>
    %42 = arith.mulf %39, %39 : vector<4x128xf32>
    %43 = arith.truncf %42 : vector<4x128xf32> to vector<4x128xbf16>
    %cst_15 = arith.constant dense<0.000000e+00> : vector<4x128xf32>
    %44 = tpu.matmul %43, %1, %cst_15 {dimension_numbers = #tpu.dot_dimension_numbers<[1], [0], [0], [1], [0, 0, 1, 1], [], []>} : vector<4x128xbf16>, vector<128x128xbf16>, vector<4x128xf32> -> vector<4x128xf32>
    %45 = arith.mulf %41, %41 : vector<4x128xf32>
    %46 = arith.subf %44, %45 : vector<4x128xf32>
    %47 = arith.subf %39, %41 : vector<4x128xf32>
    %cst_16 = arith.constant 0.000000e+00 : f32
    %48 = vector.broadcast %cst_16 : f32 to vector<4x128xf32>
    %49 = arith.maximumf %46, %48 : vector<4x128xf32>
    %cst_17 = arith.constant 9.99999974E-6 : f32
    %50 = vector.broadcast %cst_17 : f32 to vector<4x128xf32>
    %51 = arith.addf %49, %50 : vector<4x128xf32>
    %52 = math.rsqrt %51 : vector<4x128xf32>
    %53 = arith.mulf %47, %52 : vector<4x128xf32>
    %54 = vector.broadcast %6 : vector<1x128xf32> to vector<4x128xf32>
    %55 = arith.mulf %53, %54 : vector<4x128xf32>
    %56 = vector.broadcast %7 : vector<1x128xf32> to vector<4x128xf32>
    %57 = arith.addf %55, %56 : vector<4x128xf32>
    %58 = arith.truncf %57 : vector<4x128xf32> to vector<4x128xbf16>
    %c0_18 = arith.constant 0 : index
    %c0_19 = arith.constant 0 : index
    %59 = vector.load %arg4[%c0_18, %c0_19] : memref<128x512xbf16, #tpu.memory_space<vmem>>, vector<128x512xbf16>
    %cst_20 = arith.constant dense<0.000000e+00> : vector<4x512xf32>
    %60 = tpu.matmul %58, %59, %cst_20 {dimension_numbers = #tpu.dot_dimension_numbers<[1], [0], [0], [1], [0, 0, 1, 1], [], []>} : vector<4x128xbf16>, vector<128x512xbf16>, vector<4x512xf32> -> vector<4x512xf32>
    %c0_21 = arith.constant 0 : index
    %c0_22 = arith.constant 0 : index
    %61 = vector.load %arg7[%c0_21, %c0_22] : memref<1x512xf32, #tpu.memory_space<vmem>>, vector<1x512xf32>
    %62 = vector.broadcast %61 : vector<1x512xf32> to vector<4x512xf32>
    %63 = arith.addf %60, %62 : vector<4x512xf32>
    %64 = arith.mulf %63, %63 : vector<4x512xf32>
    %cst_23 = arith.constant 5.000000e-01 : f32
    %65 = vector.broadcast %cst_23 : f32 to vector<4x512xf32>
    %66 = arith.mulf %65, %63 : vector<4x512xf32>
    %cst_24 = arith.constant 0.797884583 : f32
    %67 = vector.broadcast %cst_24 : f32 to vector<4x512xf32>
    %68 = arith.mulf %67, %63 : vector<4x512xf32>
    %cst_25 = arith.constant 4.471500e-02 : f32
    %69 = vector.broadcast %cst_25 : f32 to vector<4x512xf32>
    %70 = arith.mulf %69, %64 : vector<4x512xf32>
    %cst_26 = arith.constant 1.000000e+00 : f32
    %71 = vector.broadcast %cst_26 : f32 to vector<4x512xf32>
    %72 = arith.addf %71, %70 : vector<4x512xf32>
    %73 = arith.mulf %68, %72 : vector<4x512xf32>
    %74 = math.tanh %73 : vector<4x512xf32>
    %cst_27 = arith.constant 1.000000e+00 : f32
    %75 = vector.broadcast %cst_27 : f32 to vector<4x512xf32>
    %76 = arith.addf %75, %74 : vector<4x512xf32>
    %77 = arith.mulf %66, %76 : vector<4x512xf32>
    %78 = arith.truncf %77 : vector<4x512xf32> to vector<4x512xbf16>
    %c0_28 = arith.constant 0 : index
    %c0_29 = arith.constant 0 : index
    %79 = vector.load %arg5[%c0_28, %c0_29] : memref<512x128xbf16, #tpu.memory_space<vmem>>, vector<512x128xbf16>
    %cst_30 = arith.constant dense<0.000000e+00> : vector<4x128xf32>
    %80 = tpu.matmul %78, %79, %cst_30 {dimension_numbers = #tpu.dot_dimension_numbers<[1], [0], [0], [1], [0, 0, 1, 1], [], []>} : vector<4x512xbf16>, vector<512x128xbf16>, vector<4x128xf32> -> vector<4x128xf32>
    %81 = vector.broadcast %8 : vector<1x128xf32> to vector<4x128xf32>
    %82 = arith.addf %80, %81 : vector<4x128xf32>
    %83 = arith.addf %39, %82 : vector<4x128xf32>
    %c0_31 = arith.constant 0 : index
    %c0_32 = arith.constant 0 : index
    %84 = vector.load %arg8[%c0_31, %c0_32] : memref<4x128xf32, #tpu.memory_space<vmem>>, vector<4x128xf32>
    tpu.vector_store %arg8[%c0_31, %c0_32], %83 {strides = array<i32>} : memref<4x128xf32, #tpu.memory_space<vmem>>, vector<4x128xf32>,
    return
  }
  func.func @transform_0(%arg0: i32) -> (i32, i32) {
    %c0_i32 = arith.constant 0 : i32
    %c0_i32_0 = arith.constant 0 : i32
    return %arg0, %c0_i32 : i32, i32
  }
  func.func @transform_1(%arg0: i32) -> (i32, i32) {
    %c0_i32 = arith.constant 0 : i32
    %c0_i32_0 = arith.constant 0 : i32
    %c0_i32_1 = arith.constant 0 : i32
    return %c0_i32, %c0_i32_0 : i32, i32
  }
  func.func @transform_2(%arg0: i32) -> (i32, i32) {
    %c0_i32 = arith.constant 0 : i32
    %c0_i32_0 = arith.constant 0 : i32
    %c0_i32_1 = arith.constant 0 : i32
    return %c0_i32, %c0_i32_0 : i32, i32
  }
  func.func @transform_3(%arg0: i32) -> (i32, i32) {
    %c0_i32 = arith.constant 0 : i32
    %c0_i32_0 = arith.constant 0 : i32
    %c0_i32_1 = arith.constant 0 : i32
    return %c0_i32, %c0_i32_0 : i32, i32
  }
  func.func @transform_4(%arg0: i32) -> (i32, i32) {
    %c0_i32 = arith.constant 0 : i32
    %c0_i32_0 = arith.constant 0 : i32
    %c0_i32_1 = arith.constant 0 : i32
    return %c0_i32, %c0_i32_0 : i32, i32
  }
  func.func @transform_5(%arg0: i32) -> (i32, i32) {
    %c0_i32 = arith.constant 0 : i32
    %c0_i32_0 = arith.constant 0 : i32
    %c0_i32_1 = arith.constant 0 : i32
    return %c0_i32, %c0_i32_0 : i32, i32
  }
  func.func @transform_6(%arg0: i32) -> (i32, i32) {
    %c0_i32 = arith.constant 0 : i32
    %c0_i32_0 = arith.constant 0 : i32
    %c0_i32_1 = arith.constant 0 : i32
    return %c0_i32, %c0_i32_0 : i32, i32
  }
  func.func @transform_7(%arg0: i32) -> (i32, i32) {
    %c0_i32 = arith.constant 0 : i32
    %c0_i32_0 = arith.constant 0 : i32
    return %arg0, %c0_i32 : i32, i32
  }
}

</mosaic_0001>

<llo_original>
// kernel: block_forward.1
$region0: #{block_forward.1}
  #allocation0 [shape = 'u32[]', space=smem, size = 0x4, offset = 0x4, fixed_abs, tag = 'smem constant byte address 0x4 - core index']
  #allocation1 [shape = 'u32[72,128]{1,0:T(1,128)}', space=vmem, size = 0x9000, scoped, tag = 'internal scratch']
  %s0 = inlined_call_operand.vmem [shape: f32[4,128], index: 0, kind: input, shape index: {}]
  %s1 = inlined_call_operand.hbm [shape: bf16[128,128], index: 1, kind: input, shape index: {}]
  %s2 = inlined_call_operand.hbm [shape: bf16[128,128], index: 2, kind: input, shape index: {}]
  %s3 = inlined_call_operand.hbm [shape: bf16[128,512], index: 3, kind: input, shape index: {}]
  %s4 = inlined_call_operand.hbm [shape: bf16[512,128], index: 4, kind: input, shape index: {}]
  %s5 = inlined_call_operand.vmem [shape: f32[8,128], index: 5, kind: input, shape index: {}]
  %s6 = inlined_call_operand.vmem [shape: f32[1,512], index: 6, kind: input, shape index: {}]
  %s7 = inlined_call_operand.vmem [shape: f32[4,128], index: 7, kind: output, shape index: {}]
  %s8 = sld [smem:[#allocation0]]
  $region54: #{block_forward.1} parent=0
    _
  %s10 = ssub.s32 1, %s8
  %s11 = scalar_select 0, %s10, %s8
  $region1: #{block_forward.1} parent=0
    #allocation2 [shape = 'u8[32768]{0}', space=vmem, size = 0x8000, scoped, tag = 'input window, operand 1, single buffered']
    #allocation3 [shape = 's32[1]{0}', space=sflag, size = 0x4, scoped, tag = 'scoped memory for block_forward.1']
    #allocation4 [shape = 'u8[32768]{0}', space=vmem, size = 0x8000, scoped, tag = 'input window, operand 2, single buffered']
    #allocation5 [shape = 's32[1]{0}', space=sflag, size = 0x4, scoped, tag = 'scoped memory for block_forward.1']
    #allocation6 [shape = 'u8[131072]{0}', space=vmem, size = 0x20000, scoped, tag = 'input window, operand 3, single buffered']
    #allocation7 [shape = 'u8[131072]{0}', space=vmem, size = 0x20000, scoped, tag = 'input window, operand 4, single buffered']
    #allocation8 [shape = 's32[1]{0}', space=sflag, size = 0x4, scoped, tag = 'scoped memory for block_forward.1']
    %12 = vsyncpa [#allocation3], 0
    %13 = vsyncpa [#allocation5], 0
    %14 = vsyncpa [#allocation8], 0
    // Predicated region
    $region2: #{block_forward.1} parent=1 // pred_check
      _
    $region3: #{block_forward.1} parent=1 // pred_check_branch
      %16 = sbr.rel (0) target = $region5
    $region4: #{block_forward.1} parent=1 // pred_region
      _
    $region5: #{block_forward.1} parent=1 // pred_fallthru
      _
    // Predicated region
    $region6: #{block_forward.1} parent=1 // pred_check
      _
    $region7: #{block_forward.1} parent=1 // pred_check_branch
      %18 = sbr.rel (0) target = $region9
    $region8: #{block_forward.1} parent=1 // pred_region
      %20 = vsyncadd [#allocation3], 0
      %s21 = sshll.u32 %s1, 4
      %s22 = int_to_ptr.hbm [resolvable:$true] %s21
      %s23 = sshll.u32 [#allocation2], 4
      %s24 = int_to_ptr.vmem [resolvable:$true] %s23
      %29 = dma.hbm_to_vmem [thread:$0]  %s22, 1024, %s24, [#allocation3], 64, 64, 4
    $region9: #{block_forward.1} parent=1 // pred_fallthru
      _
    // Predicated region
    $region10: #{block_forward.1} parent=1 // pred_check
      _
    $region11: #{block_forward.1} parent=1 // pred_check_branch
      %31 = sbr.rel (0) target = $region13
    $region12: #{block_forward.1} parent=1 // pred_region
      %33 = vsyncadd [#allocation5], 0
      %s34 = sshll.u32 %s2, 4
      %s35 = int_to_ptr.hbm [resolvable:$true] %s34
      %s36 = sshll.u32 [#allocation4], 4
      %s37 = int_to_ptr.vmem [resolvable:$true] %s36
      %42 = dma.hbm_to_vmem [thread:$0]  %s35, 1024, %s37, [#allocation5], 64, 64, 4
    $region13: #{block_forward.1} parent=1 // pred_fallthru
      _
    // Predicated region
    $region14: #{block_forward.1} parent=1 // pred_check
      _
    $region15: #{block_forward.1} parent=1 // pred_check_branch
      %44 = sbr.rel (0) target = $region17
    $region16: #{block_forward.1} parent=1 // pred_region
      %46 = vsyncadd [#allocation5], 0
      %s47 = sshll.u32 %s3, 4
      %s48 = int_to_ptr.hbm [resolvable:$true] %s47
      %s49 = sshll.u32 [#allocation6], 4
      %s50 = int_to_ptr.vmem [resolvable:$true] %s49
      %55 = dma.hbm_to_vmem [thread:$0]  %s48, 4096, %s50, [#allocation5], 256, 256, 16
    $region17: #{block_forward.1} parent=1 // pred_fallthru
      _
    // Predicated region
    $region18: #{block_forward.1} parent=1 // pred_check
      _
    $region19: #{block_forward.1} parent=1 // pred_check_branch
      %57 = sbr.rel (0) target = $region21
    $region20: #{block_forward.1} parent=1 // pred_region
      %59 = vsyncadd [#allocation8], 0
      %s60 = sshll.u32 %s4, 4
      %s61 = int_to_ptr.hbm [resolvable:$true] %s60
      %s62 = sshll.u32 [#allocation7], 4
      %s63 = int_to_ptr.vmem [resolvable:$true] %s62
      %68 = dma.hbm_to_vmem [thread:$0]  %s61, 4096, %s63, [#allocation8], 64, 64, 4
    $region21: #{block_forward.1} parent=1 // pred_fallthru
      _
    // Predicated region
    $region22: #{block_forward.1} parent=1 // pred_check
      _
    $region23: #{block_forward.1} parent=1 // pred_check_branch
      %70 = sbr.rel (0) target = $region25
    $region24: #{block_forward.1} parent=1 // pred_region
      _
    $region25: #{block_forward.1} parent=1 // pred_fallthru
      _
    // Predicated region
    $region26: #{block_forward.1} parent=1 // pred_check
      _
    $region27: #{block_forward.1} parent=1 // pred_check_branch
      %72 = sbr.rel (0) target = $region29
    $region28: #{block_forward.1} parent=1 // pred_region
      _
    $region29: #{block_forward.1} parent=1 // pred_fallthru
      _
    // Predicated region
    $region30: #{block_forward.1} parent=1 // pred_check
      _
    $region31: #{block_forward.1} parent=1 // pred_check_branch
      %74 = sbr.rel (0) target = $region33
    $region32: #{block_forward.1} parent=1 // pred_region
      %76 = dma.done [#allocation3], 1024
    $region33: #{block_forward.1} parent=1 // pred_fallthru
      _
    // Predicated region
    $region34: #{block_forward.1} parent=1 // pred_check
      _
    $region35: #{block_forward.1} parent=1 // pred_check_branch
      %78 = sbr.rel (0) target = $region37
    $region36: #{block_forward.1} parent=1 // pred_region
      %80 = dma.done [#allocation5], 1024
    $region37: #{block_forward.1} parent=1 // pred_fallthru
      _
    // Predicated region
    $region38: #{block_forward.1} parent=1 // pred_check
      _
    $region39: #{block_forward.1} parent=1 // pred_check_branch
      %82 = sbr.rel (0) target = $region41
    $region40: #{block_forward.1} parent=1 // pred_region
      %84 = dma.done [#allocation5], 4096
    $region41: #{block_forward.1} parent=1 // pred_fallthru
      _
    // Predicated region
    $region42: #{block_forward.1} parent=1 // pred_check
      _
    $region43: #{block_forward.1} parent=1 // pred_check_branch
      %86 = sbr.rel (0) target = $region45
    $region44: #{block_forward.1} parent=1 // pred_region
      %88 = dma.done [#allocation8], 4096
    $region45: #{block_forward.1} parent=1 // pred_fallthru
      _
    %v89 = vld [vmem:[%s0] sm:$0xf]
    %v90 = vld [vmem:[#allocation2] sm:$0xf]
    %v91 = vld [vmem:[#allocation2 + $0x4] sm:$0xf]
    %v92 = vld [vmem:[#allocation2 + $0x8] sm:$0xf]
    %v93 = vld [vmem:[#allocation2 + $0xc] sm:$0xf]
    %v94 = vld [vmem:[#allocation2 + $0x10] sm:$0xf]
    %v95 = vld [vmem:[#allocation2 + $0x14] sm:$0xf]
    %v96 = vld [vmem:[#allocation2 + $0x18] sm:$0xf]
    %v97 = vld [vmem:[#allocation2 + $0x1c] sm:$0xf]
    %v98 = vld [vmem:[#allocation2 + $0x20] sm:$0xf]
    %v99 = vld [vmem:[#allocation2 + $0x24] sm:$0xf]
    %v100 = vld [vmem:[#allocation2 + $0x28] sm:$0xf]
    %v101 = vld [vmem:[#allocation2 + $0x2c] sm:$0xf]
    %v102 = vld [vmem:[#allocation2 + $0x30] sm:$0xf]
    %v103 = vld [vmem:[#allocation2 + $0x34] sm:$0xf]
    %v104 = vld [vmem:[#allocation2 + $0x38] sm:$0xf]
    %v105 = vld [vmem:[#allocation2 + $0x3c] sm:$0xf]
    %v106 = vld [vmem:[#allocation4] sm:$0xf]
    %v107 = vld [vmem:[#allocation4 + $0x4] sm:$0xf]
    %v108 = vld [vmem:[#allocation4 + $0x8] sm:$0xf]
    %v109 = vld [vmem:[#allocation4 + $0xc] sm:$0xf]
    %v110 = vld [vmem:[#allocation4 + $0x10] sm:$0xf]
    %v111 = vld [vmem:[#allocation4 + $0x14] sm:$0xf]
    %v112 = vld [vmem:[#allocation4 + $0x18] sm:$0xf]
    %v113 = vld [vmem:[#allocation4 + $0x1c] sm:$0xf]
    %v114 = vld [vmem:[#allocation4 + $0x20] sm:$0xf]
    %v115 = vld [vmem:[#allocation4 + $0x24] sm:$0xf]
    %v116 = vld [vmem:[#allocation4 + $0x28] sm:$0xf]
    %v117 = vld [vmem:[#allocation4 + $0x2c] sm:$0xf]
    %v118 = vld [vmem:[#allocation4 + $0x30] sm:$0xf]
    %v119 = vld [vmem:[#allocation4 + $0x34] sm:$0xf]
    %v120 = vld [vmem:[#allocation4 + $0x38] sm:$0xf]
    %v121 = vld [vmem:[#allocation4 + $0x3c] sm:$0xf]
    %v122 = vld [vmem:[%s5] sm:$0xff]
    %v123 = vpack.c.bf16 %v89, %v89
    %v140 = vunpack.c.l.b16 %v90
    %v141 = vunpack.c.l.b16 %v91
    %v142 = vunpack.c.l.b16 %v92
    %v143 = vunpack.c.l.b16 %v93
    %v144 = vunpack.c.l.b16 %v94
    %v145 = vunpack.c.l.b16 %v95
    %v146 = vunpack.c.l.b16 %v96
    %v147 = vunpack.c.l.b16 %v97
    %v148 = vunpack.c.l.b16 %v98
    %v149 = vunpack.c.l.b16 %v99
    %v150 = vunpack.c.l.b16 %v100
    %v151 = vunpack.c.l.b16 %v101
    %v152 = vunpack.c.l.b16 %v102
    %v153 = vunpack.c.l.b16 %v103
    %v154 = vunpack.c.l.b16 %v104
    %v155 = vunpack.c.l.b16 %v105
    %v156 = vpack.c.b16 %v141, %v140
    %v157 = vpack.c.b16 %v143, %v142
    %v158 = vpack.c.b16 %v145, %v144
    %v159 = vpack.c.b16 %v147, %v146
    %v160 = vpack.c.b16 %v149, %v148
    %v161 = vpack.c.b16 %v151, %v150
    %v162 = vpack.c.b16 %v153, %v152
    %v163 = vpack.c.b16 %v155, %v154
    %172 = vmatpush.bf16.msra.mxu0 %v163
    %173 = vmatpush.bf16.msra.mxu0 %v162
    %174 = vmatpush.bf16.msra.mxu0 %v161
    %175 = vmatpush.bf16.msra.mxu0 %v160
    %176 = vmatpush.bf16.msra.mxu0 %v159
    %177 = vmatpush.bf16.msra.mxu0 %v158
    %178 = vmatpush.bf16.msra.mxu0 %v157
    %179 = vmatpush.bf16.msra.mxu0 %v156
    %180 = vmatmul.bf16.gmra.mxu0 %v123
    %v181 = vpop.f32.mrf.mxu0
    %v182 = vadd.f32 0.0, %v181
    %v183 = vpop.f32.mrf.mxu0
    %184 = vdwg.mxu0
    %v185 = vmul.f32 %v89, %v89
    %v186 = vpack.c.bf16 %v185, %v185
    %187 = vmatpush.bf16.msra.mxu0 %v163
    %188 = vmatpush.bf16.msra.mxu0 %v162
    %189 = vmatpush.bf16.msra.mxu0 %v161
    %190 = vmatpush.bf16.msra.mxu0 %v160
    %191 = vmatpush.bf16.msra.mxu0 %v159
    %192 = vmatpush.bf16.msra.mxu0 %v158
    %193 = vmatpush.bf16.msra.mxu0 %v157
    %194 = vmatpush.bf16.msra.mxu0 %v156
    %195 = vmatmul.bf16.gmra.mxu0 %v186
    %v196 = vpop.f32.mrf.mxu0
    %v197 = vadd.f32 0.0, %v196
    %v198 = vpop.f32.mrf.mxu0
    %199 = vdwg.mxu0
    %v200 = vmul.f32 %v182, %v182
    %v201 = vsub.f32 %v197, %v200
    %v202 = vmax.f32 %v201, 0.0
    %v203 = vadd.f32 %v202, 1e-05
    %v204 = vrsqrt.pop %v203
    %v205 = vmul.f32 %v204, %v203
    %v206 = vmul.f32 %v205, %v204
    %v207 = vmul.f32 0.5, %v206
    %v208 = vsub.f32 1.5, %v207
    %v209 = vmul.f32 %v204, %v208
    %vm210 = vweird.f32 %v203
    %vm211 = vweird.f32 %v204
    %vm212 = vmor %vm210, %vm211
    %v213 = vsel %vm212, %v204, %v209
    %v230 = vunpack.c.l.b16 %v106
    %v231 = vunpack.c.l.b16 %v107
    %v232 = vunpack.c.l.b16 %v108
    %v233 = vunpack.c.l.b16 %v109
    %v234 = vunpack.c.l.b16 %v110
    %v235 = vunpack.c.l.b16 %v111
    %v236 = vunpack.c.l.b16 %v112
    %v237 = vunpack.c.l.b16 %v113
    %v238 = vunpack.c.l.b16 %v114
    %v239 = vunpack.c.l.b16 %v115
    %v240 = vunpack.c.l.b16 %v116
    %v241 = vunpack.c.l.b16 %v117
    %v242 = vunpack.c.l.b16 %v118
    %v243 = vunpack.c.l.b16 %v119
    %v244 = vunpack.c.l.b16 %v120
    %v245 = vunpack.c.l.b16 %v121
    %v246 = vpack.c.b16 %v231, %v230
    %v247 = vpack.c.b16 %v233, %v232
    %v248 = vpack.c.b16 %v235, %v234
    %v249 = vpack.c.b16 %v237, %v236
    %v250 = vpack.c.b16 %v239, %v238
    %v251 = vpack.c.b16 %v241, %v240
    %v252 = vpack.c.b16 %v243, %v242
    %v253 = vpack.c.b16 %v245, %v244
    %262 = vmatpush.bf16.msra.mxu0 %v253
    %263 = vmatpush.bf16.msra.mxu0 %v252
    %264 = vmatpush.bf16.msra.mxu0 %v251
    %265 = vmatpush.bf16.msra.mxu0 %v250
    %266 = vmatpush.bf16.msra.mxu0 %v249
    %267 = vmatpush.bf16.msra.mxu0 %v248
    %268 = vmatpush.bf16.msra.mxu0 %v247
    %269 = vmatpush.bf16.msra.mxu0 %v246
    %270 = vmatmul.bf16.gmra.mxu0 %v123
    %v271 = vpop.f32.mrf.mxu0
    %v272 = vadd.f32 0.0, %v271
    %v273 = vpop.f32.mrf.mxu0
    %274 = vdwg.mxu0
    %v275 = vmul.f32 %v213, %v272
    %v276 = vperm.slane %v122, 5
    %v277 = vadd.f32 %v275, %v276
    %v278 = vmul.f32 %v277, %v277
    %v279 = vpack.c.bf16 %v278, %v278
    %280 = vmatpush.bf16.msra.mxu0 %v163
    %281 = vmatpush.bf16.msra.mxu0 %v162
    %282 = vmatpush.bf16.msra.mxu0 %v161
    %283 = vmatpush.bf16.msra.mxu0 %v160
    %284 = vmatpush.bf16.msra.mxu0 %v159
    %285 = vmatpush.bf16.msra.mxu0 %v158
    %286 = vmatpush.bf16.msra.mxu0 %v157
    %287 = vmatpush.bf16.msra.mxu0 %v156
    %288 = vmatmul.bf16.gmra.mxu0 %v279
    %v289 = vpop.f32.mrf.mxu0
    %v290 = vadd.f32 0.0, %v289
    %v291 = vpop.f32.mrf.mxu0
    %292 = vdwg.mxu0
    %v293 = vmax.f32 %v290, 0.0
    %v294 = vadd.f32 %v293, 1e-05
    %v295 = vrsqrt.pop %v294
    %v296 = vmul.f32 %v295, %v294
    %v297 = vmul.f32 %v296, %v295
    %v298 = vmul.f32 0.5, %v297
    %v299 = vsub.f32 1.5, %v298
    %v300 = vmul.f32 %v295, %v299
    %vm301 = vweird.f32 %v294
    %vm302 = vweird.f32 %v295
    %vm303 = vmor %vm301, %vm302
    %v304 = vsel %vm303, %v295, %v300
    %v305 = vmul.f32 %v277, %v304
    %v306 = vperm.slane %v122, 0
    %v307 = vmul.f32 %v305, %v306
    %v308 = vperm.slane %v122, 1
    %v309 = vadd.f32 %v307, %v308
    %v310 = vadd.f32 %v89, %v309
    %v311 = vpack.c.bf16 %v310, %v310
    %312 = vmatpush.bf16.msra.mxu0 %v163
    %313 = vmatpush.bf16.msra.mxu0 %v162
    %314 = vmatpush.bf16.msra.mxu0 %v161
    %315 = vmatpush.bf16.msra.mxu0 %v160
    %316 = vmatpush.bf16.msra.mxu0 %v159
    %317 = vmatpush.bf16.msra.mxu0 %v158
    %318 = vmatpush.bf16.msra.mxu0 %v157
    %319 = vmatpush.bf16.msra.mxu0 %v156
    %320 = vmatmul.bf16.gmra.mxu0 %v311
    %v321 = vpop.f32.mrf.mxu0
    %v322 = vadd.f32 0.0, %v321
    %v323 = vpop.f32.mrf.mxu0
    %324 = vdwg.mxu0
    %v325 = vmul.f32 %v310, %v310
    %v326 = vpack.c.bf16 %v325, %v325
    %327 = vmatpush.bf16.msra.mxu0 %v163
    %328 = vmatpush.bf16.msra.mxu0 %v162
    %329 = vmatpush.bf16.msra.mxu0 %v161
    %330 = vmatpush.bf16.msra.mxu0 %v160
    %331 = vmatpush.bf16.msra.mxu0 %v159
    %332 = vmatpush.bf16.msra.mxu0 %v158
    %333 = vmatpush.bf16.msra.mxu0 %v157
    %334 = vmatpush.bf16.msra.mxu0 %v156
    %335 = vmatmul.bf16.gmra.mxu0 %v326
    %v336 = vpop.f32.mrf.mxu0
    %v337 = vadd.f32 0.0, %v336
    %v338 = vpop.f32.mrf.mxu0
    %339 = vdwg.mxu0
    %v340 = vmul.f32 %v322, %v322
    %v341 = vsub.f32 %v337, %v340
    %v342 = vsub.f32 %v310, %v322
    %v343 = vmax.f32 %v341, 0.0
    %v344 = vadd.f32 %v343, 1e-05
    %v345 = vrsqrt.pop %v344
    %v346 = vmul.f32 %v345, %v344
    %v347 = vmul.f32 %v346, %v345
    %v348 = vmul.f32 0.5, %v347
    %v349 = vsub.f32 1.5, %v348
    %v350 = vmul.f32 %v345, %v349
    %vm351 = vweird.f32 %v344
    %vm352 = vweird.f32 %v345
    %vm353 = vmor %vm351, %vm352
    %v354 = vsel %vm353, %v345, %v350
    %v355 = vmul.f32 %v342, %v354
    %v356 = vperm.slane %v122, 2
    %v357 = vmul.f32 %v355, %v356
    %v358 = vperm.slane %v122, 3
    %v359 = vadd.f32 %v357, %v358
    %v360 = vpack.c.bf16 %v359, %v359
    %v361 = vld [vmem:[#allocation6] sm:$0xff]
    %v362 = vld [vmem:[#allocation6 + $0x8] sm:$0xff]
    %v363 = vld [vmem:[#allocation6 + $0x10] sm:$0xff]
    %v364 = vld [vmem:[#allocation6 + $0x18] sm:$0xff]
    %v365 = vld [vmem:[#allocation6 + $0x20] sm:$0xff]
    %v366 = vld [vmem:[#allocation6 + $0x28] sm:$0xff]
    %v367 = vld [vmem:[#allocation6 + $0x30] sm:$0xff]
    %v368 = vld [vmem:[#allocation6 + $0x38] sm:$0xff]
    %v369 = vld [vmem:[#allocation6 + $0x40] sm:$0xff]
    %v370 = vld [vmem:[#allocation6 + $0x48] sm:$0xff]
    %v371 = vld [vmem:[#allocation6 + $0x50] sm:$0xff]
    %v372 = vld [vmem:[#allocation6 + $0x58] sm:$0xff]
    %v373 = vld [vmem:[#allocation6 + $0x60] sm:$0xff]
    %v374 = vld [vmem:[#allocation6 + $0x68] sm:$0xff]
    %v375 = vld [vmem:[#allocation6 + $0x70] sm:$0xff]
    %v376 = vld [vmem:[#allocation6 + $0x78] sm:$0xff]
    %v377 = vld [vmem:[#allocation6 + $0x80] sm:$0xff]
    %v378 = vld [vmem:[#allocation6 + $0x88] sm:$0xff]
    %v379 = vld [vmem:[#allocation6 + $0x90] sm:$0xff]
    %v380 = vld [vmem:[#allocation6 + $0x98] sm:$0xff]
    %v381 = vld [vmem:[#allocation6 + $0xa0] sm:$0xff]
    %v382 = vld [vmem:[#allocation6 + $0xa8] sm:$0xff]
    %v383 = vld [vmem:[#allocation6 + $0xb0] sm:$0xff]
    %v384 = vld [vmem:[#allocation6 + $0xb8] sm:$0xff]
    %v385 = vld [vmem:[#allocation6 + $0xc0] sm:$0xff]
    %v386 = vld [vmem:[#allocation6 + $0xc8] sm:$0xff]
    %v387 = vld [vmem:[#allocation6 + $0xd0] sm:$0xff]
    %v388 = vld [vmem:[#allocation6 + $0xd8] sm:$0xff]
    %v389 = vld [vmem:[#allocation6 + $0xe0] sm:$0xff]
    %v390 = vld [vmem:[#allocation6 + $0xe8] sm:$0xff]
    %v391 = vld [vmem:[#allocation6 + $0xf0] sm:$0xff]
    %v392 = vld [vmem:[#allocation6 + $0xf8] sm:$0xff]
    %v393 = vld [vmem:[%s6] sm:$0xf]
    %v395 = vperm.slane %v393, 0
    %v396 = vperm.slane %v393, 1
    %v397 = vperm.slane %v393, 2
    %v398 = vperm.slane %v393, 3
    %v435 = vunpack.c.l.b16 %v361
    %v436 = vunpack.c.h.b16 %v361
    %v437 = vunpack.c.l.b16 %v362
    %v438 = vunpack.c.h.b16 %v362
    %v439 = vunpack.c.l.b16 %v363
    %v440 = vunpack.c.h.b16 %v363
    %v441 = vunpack.c.l.b16 %v364
    %v442 = vunpack.c.h.b16 %v364
    %v443 = vunpack.c.l.b16 %v365
    %v444 = vunpack.c.h.b16 %v365
    %v445 = vunpack.c.l.b16 %v366
    %v446 = vunpack.c.h.b16 %v366
    %v447 = vunpack.c.l.b16 %v367
    %v448 = vunpack.c.h.b16 %v367
    %v449 = vunpack.c.l.b16 %v368
    %v450 = vunpack.c.h.b16 %v368
    %v451 = vunpack.c.l.b16 %v369
    %v452 = vunpack.c.h.b16 %v369
    %v453 = vunpack.c.l.b16 %v370
    %v454 = vunpack.c.h.b16 %v370
    %v455 = vunpack.c.l.b16 %v371
    %v456 = vunpack.c.h.b16 %v371
    %v457 = vunpack.c.l.b16 %v372
    %v458 = vunpack.c.h.b16 %v372
    %v459 = vunpack.c.l.b16 %v373
    %v460 = vunpack.c.h.b16 %v373
    %v461 = vunpack.c.l.b16 %v374
    %v462 = vunpack.c.h.b16 %v374
    %v463 = vunpack.c.l.b16 %v375
    %v464 = vunpack.c.h.b16 %v375
    %v465 = vunpack.c.l.b16 %v376
    %v466 = vunpack.c.h.b16 %v376
    %v467 = vunpack.c.l.b16 %v377
    %v468 = vunpack.c.h.b16 %v377
    %v469 = vunpack.c.l.b16 %v378
    %v470 = vunpack.c.h.b16 %v378
    %v471 = vunpack.c.l.b16 %v379
    %v472 = vunpack.c.h.b16 %v379
    %v473 = vunpack.c.l.b16 %v380
    %v474 = vunpack.c.h.b16 %v380
    %v475 = vunpack.c.l.b16 %v381
    %v476 = vunpack.c.h.b16 %v381
    %v477 = vunpack.c.l.b16 %v382
    %v478 = vunpack.c.h.b16 %v382
    %v479 = vunpack.c.l.b16 %v383
    %v480 = vunpack.c.h.b16 %v383
    %v481 = vunpack.c.l.b16 %v384
    %v482 = vunpack.c.h.b16 %v384
    %v483 = vunpack.c.l.b16 %v385
    %v484 = vunpack.c.h.b16 %v385
    %v485 = vunpack.c.l.b16 %v386
    %v486 = vunpack.c.h.b16 %v386
    %v487 = vunpack.c.l.b16 %v387
    %v488 = vunpack.c.h.b16 %v387
    %v489 = vunpack.c.l.b16 %v388
    %v490 = vunpack.c.h.b16 %v388
    %v491 = vunpack.c.l.b16 %v389
    %v492 = vunpack.c.h.b16 %v389
    %v493 = vunpack.c.l.b16 %v390
    %v494 = vunpack.c.h.b16 %v390
    %v495 = vunpack.c.l.b16 %v391
    %v496 = vunpack.c.h.b16 %v391
    %v497 = vunpack.c.l.b16 %v392
    %v498 = vunpack.c.h.b16 %v392
    %v499 = vpack.c.b16 %v439, %v435
    %v500 = vpack.c.b16 %v440, %v436
    %v501 = vpack.c.b16 %v441, %v437
    %v502 = vpack.c.b16 %v442, %v438
    %v503 = vpack.c.b16 %v447, %v443
    %v504 = vpack.c.b16 %v448, %v444
    %v505 = vpack.c.b16 %v449, %v445
    %v506 = vpack.c.b16 %v450, %v446
    %v507 = vpack.c.b16 %v455, %v451
    %v508 = vpack.c.b16 %v456, %v452
    %v509 = vpack.c.b16 %v457, %v453
    %v510 = vpack.c.b16 %v458, %v454
    %v511 = vpack.c.b16 %v463, %v459
    %v512 = vpack.c.b16 %v464, %v460
    %v513 = vpack.c.b16 %v465, %v461
    %v514 = vpack.c.b16 %v466, %v462
    %v515 = vpack.c.b16 %v471, %v467
    %v516 = vpack.c.b16 %v472, %v468
    %v517 = vpack.c.b16 %v473, %v469
    %v518 = vpack.c.b16 %v474, %v470
    %v519 = vpack.c.b16 %v479, %v475
    %v520 = vpack.c.b16 %v480, %v476
    %v521 = vpack.c.b16 %v481, %v477
    %v522 = vpack.c.b16 %v482, %v478
    %v523 = vpack.c.b16 %v487, %v483
    %v524 = vpack.c.b16 %v488, %v484
    %v525 = vpack.c.b16 %v489, %v485
    %v526 = vpack.c.b16 %v490, %v486
    %v527 = vpack.c.b16 %v495, %v491
    %v528 = vpack.c.b16 %v496, %v492
    %v529 = vpack.c.b16 %v497, %v493
    %v530 = vpack.c.b16 %v498, %v494
    %563 = vmatpush.bf16.msra.mxu0 %v527
    %564 = vmatpush.bf16.msra.mxu0 %v523
    %565 = vmatpush.bf16.msra.mxu0 %v519
    %566 = vmatpush.bf16.msra.mxu0 %v515
    %567 = vmatpush.bf16.msra.mxu0 %v511
    %568 = vmatpush.bf16.msra.mxu0 %v507
    %569 = vmatpush.bf16.msra.mxu0 %v503
    %570 = vmatpush.bf16.msra.mxu0 %v499
    %571 = vmatmul.bf16.gmra.mxu0 %v360
    %v572 = vpop.f32.mrf.mxu0
    %v573 = vadd.f32 %v395, %v572
    %v574 = vpop.f32.mrf.mxu0
    %575 = vdwg.mxu0
    %576 = vmatpush.bf16.msra.mxu0 %v528
    %577 = vmatpush.bf16.msra.mxu0 %v524
    %578 = vmatpush.bf16.msra.mxu0 %v520
    %579 = vmatpush.bf16.msra.mxu0 %v516
    %580 = vmatpush.bf16.msra.mxu0 %v512
    %581 = vmatpush.bf16.msra.mxu0 %v508
    %582 = vmatpush.bf16.msra.mxu0 %v504
    %583 = vmatpush.bf16.msra.mxu0 %v500
    %584 = vmatmul.bf16.gmra.mxu0 %v360
    %v585 = vpop.f32.mrf.mxu0
    %v586 = vadd.f32 %v396, %v585
    %v587 = vpop.f32.mrf.mxu0
    %588 = vdwg.mxu0
    %589 = vmatpush.bf16.msra.mxu0 %v529
    %590 = vmatpush.bf16.msra.mxu0 %v525
    %591 = vmatpush.bf16.msra.mxu0 %v521
    %592 = vmatpush.bf16.msra.mxu0 %v517
    %593 = vmatpush.bf16.msra.mxu0 %v513
    %594 = vmatpush.bf16.msra.mxu0 %v509
    %595 = vmatpush.bf16.msra.mxu0 %v505
    %596 = vmatpush.bf16.msra.mxu0 %v501
    %597 = vmatmul.bf16.gmra.mxu0 %v360
    %v598 = vpop.f32.mrf.mxu0
    %v599 = vadd.f32 %v397, %v598
    %v600 = vpop.f32.mrf.mxu0
    %601 = vdwg.mxu0
    %602 = vmatpush.bf16.msra.mxu0 %v530
    %603 = vmatpush.bf16.msra.mxu0 %v526
    %604 = vmatpush.bf16.msra.mxu0 %v522
    %605 = vmatpush.bf16.msra.mxu0 %v518
    %606 = vmatpush.bf16.msra.mxu0 %v514
    %607 = vmatpush.bf16.msra.mxu0 %v510
    %608 = vmatpush.bf16.msra.mxu0 %v506
    %609 = vmatpush.bf16.msra.mxu0 %v502
    %610 = vmatmul.bf16.gmra.mxu0 %v360
    %v611 = vpop.f32.mrf.mxu0
    %v612 = vadd.f32 %v398, %v611
    %v613 = vpop.f32.mrf.mxu0
    %614 = vdwg.mxu0
    %v615 = vmul.f32 %v573, %v573
    %v616 = vmul.f32 %v586, %v586
    %v617 = vmul.f32 %v599, %v599
    %v618 = vmul.f32 %v612, %v612
    %v619 = vmul.f32 %v573, 0.5
    %v620 = vmul.f32 %v586, 0.5
    %v621 = vmul.f32 %v599, 0.5
    %v622 = vmul.f32 %v612, 0.5
    %v623 = vmul.f32 %v573, 0.7978846
    %v624 = vmul.f32 %v586, 0.7978846
    %v625 = vmul.f32 %v599, 0.7978846
    %v626 = vmul.f32 %v612, 0.7978846
    %v627 = vmul.f32 %v615, 0.044715
    %v628 = vmul.f32 %v616, 0.044715
    %v629 = vmul.f32 %v617, 0.044715
    %v630 = vmul.f32 %v618, 0.044715
    %v631 = vadd.f32 %v627, 1.0
    %v632 = vadd.f32 %v628, 1.0
    %v633 = vadd.f32 %v629, 1.0
    %v634 = vadd.f32 %v630, 1.0
    %v635 = vmul.f32 %v623, %v631
    %v636 = vmul.f32 %v624, %v632
    %v637 = vmul.f32 %v625, %v633
    %v638 = vmul.f32 %v626, %v634
    %v639 = vtanh.pop %v635
    %v640 = vtanh.pop %v636
    %v641 = vtanh.pop %v637
    %v642 = vtanh.pop %v638
    %v643 = vadd.f32 %v639, 1.0
    %v644 = vadd.f32 %v640, 1.0
    %v645 = vadd.f32 %v641, 1.0
    %v646 = vadd.f32 %v642, 1.0
    %v647 = vmul.f32 %v619, %v643
    %v648 = vmul.f32 %v620, %v644
    %v649 = vmul.f32 %v621, %v645
    %v650 = vmul.f32 %v622, %v646
    %v651 = vpack.c.bf16 %v647, %v647
    %v652 = vpack.c.bf16 %v648, %v648
    %v653 = vpack.c.bf16 %v649, %v649
    %v654 = vpack.c.bf16 %v650, %v650
    %v655 = vld [vmem:[#allocation7] sm:$0xf]
    %v656 = vld [vmem:[#allocation7 + $0x4] sm:$0xf]
    %v657 = vld [vmem:[#allocation7 + $0x8] sm:$0xf]
    %v658 = vld [vmem:[#allocation7 + $0xc] sm:$0xf]
    %v659 = vld [vmem:[#allocation7 + $0x10] sm:$0xf]
    %v660 = vld [vmem:[#allocation7 + $0x14] sm:$0xf]
    %v661 = vld [vmem:[#allocation7 + $0x18] sm:$0xf]
    %v662 = vld [vmem:[#allocation7 + $0x1c] sm:$0xf]
    %v663 = vld [vmem:[#allocation7 + $0x20] sm:$0xf]
    %v664 = vld [vmem:[#allocation7 + $0x24] sm:$0xf]
    %v665 = vld [vmem:[#allocation7 + $0x28] sm:$0xf]
    %v666 = vld [vmem:[#allocation7 + $0x2c] sm:$0xf]
    %v667 = vld [vmem:[#allocation7 + $0x30] sm:$0xf]
    %v668 = vld [vmem:[#allocation7 + $0x34] sm:$0xf]
    %v669 = vld [vmem:[#allocation7 + $0x38] sm:$0xf]
    %v670 = vld [vmem:[#allocation7 + $0x3c] sm:$0xf]
    %v671 = vld [vmem:[#allocation7 + $0x40] sm:$0xf]
    %v672 = vld [vmem:[#allocation7 + $0x44] sm:$0xf]
    %v673 = vld [vmem:[#allocation7 + $0x48] sm:$0xf]
    %v674 = vld [vmem:[#allocation7 + $0x4c] sm:$0xf]
    %v675 = vld [vmem:[#allocation7 + $0x50] sm:$0xf]
    %v676 = vld [vmem:[#allocation7 + $0x54] sm:$0xf]
    %v677 = vld [vmem:[#allocation7 + $0x58] sm:$0xf]
    %v678 = vld [vmem:[#allocation7 + $0x5c] sm:$0xf]
    %v679 = vld [vmem:[#allocation7 + $0x60] sm:$0xf]
    %v680 = vld [vmem:[#allocation7 + $0x64] sm:$0xf]
    %v681 = vld [vmem:[#allocation7 + $0x68] sm:$0xf]
    %v682 = vld [vmem:[#allocation7 + $0x6c] sm:$0xf]
    %v683 = vld [vmem:[#allocation7 + $0x70] sm:$0xf]
    %v684 = vld [vmem:[#allocation7 + $0x74] sm:$0xf]
    %v685 = vld [vmem:[#allocation7 + $0x78] sm:$0xf]
    %v686 = vld [vmem:[#allocation7 + $0x7c] sm:$0xf]
    %v687 = vld [vmem:[#allocation7 + $0x80] sm:$0xf]
    %v688 = vld [vmem:[#allocation7 + $0x84] sm:$0xf]
    %v689 = vld [vmem:[#allocation7 + $0x88] sm:$0xf]
    %v690 = vld [vmem:[#allocation7 + $0x8c] sm:$0xf]
    %v691 = vld [vmem:[#allocation7 + $0x90] sm:$0xf]
    %v692 = vld [vmem:[#allocation7 + $0x94] sm:$0xf]
    %v693 = vld [vmem:[#allocation7 + $0x98] sm:$0xf]
    %v694 = vld [vmem:[#allocation7 + $0x9c] sm:$0xf]
    %v695 = vld [vmem:[#allocation7 + $0xa0] sm:$0xf]
    %v696 = vld [vmem:[#allocation7 + $0xa4] sm:$0xf]
    %v697 = vld [vmem:[#allocation7 + $0xa8] sm:$0xf]
    %v698 = vld [vmem:[#allocation7 + $0xac] sm:$0xf]
    %v699 = vld [vmem:[#allocation7 + $0xb0] sm:$0xf]
    %v700 = vld [vmem:[#allocation7 + $0xb4] sm:$0xf]
    %v701 = vld [vmem:[#allocation7 + $0xb8] sm:$0xf]
    %v702 = vld [vmem:[#allocation7 + $0xbc] sm:$0xf]
    %v703 = vld [vmem:[#allocation7 + $0xc0] sm:$0xf]
    %v704 = vld [vmem:[#allocation7 + $0xc4] sm:$0xf]
    %v705 = vld [vmem:[#allocation7 + $0xc8] sm:$0xf]
    %v706 = vld [vmem:[#allocation7 + $0xcc] sm:$0xf]
    %v707 = vld [vmem:[#allocation7 + $0xd0] sm:$0xf]
    %v708 = vld [vmem:[#allocation7 + $0xd4] sm:$0xf]
    %v709 = vld [vmem:[#allocation7 + $0xd8] sm:$0xf]
    %v710 = vld [vmem:[#allocation7 + $0xdc] sm:$0xf]
    %v711 = vld [vmem:[#allocation7 + $0xe0] sm:$0xf]
    %v712 = vld [vmem:[#allocation7 + $0xe4] sm:$0xf]
    %v713 = vld [vmem:[#allocation7 + $0xe8] sm:$0xf]
    %v714 = vld [vmem:[#allocation7 + $0xec] sm:$0xf]
    %v715 = vld [vmem:[#allocation7 + $0xf0] sm:$0xf]
    %v716 = vld [vmem:[#allocation7 + $0xf4] sm:$0xf]
    %v717 = vld [vmem:[#allocation7 + $0xf8] sm:$0xf]
    %v718 = vld [vmem:[#allocation7 + $0xfc] sm:$0xf]
    %v719 = vperm.slane %v122, 4
    %v784 = vunpack.c.l.b16 %v655
    %v785 = vunpack.c.l.b16 %v656
    %v786 = vunpack.c.l.b16 %v657
    %v787 = vunpack.c.l.b16 %v658
    %v788 = vunpack.c.l.b16 %v659
    %v789 = vunpack.c.l.b16 %v660
    %v790 = vunpack.c.l.b16 %v661
    %v791 = vunpack.c.l.b16 %v662
    %v792 = vunpack.c.l.b16 %v663
    %v793 = vunpack.c.l.b16 %v664
    %v794 = vunpack.c.l.b16 %v665
    %v795 = vunpack.c.l.b16 %v666
    %v796 = vunpack.c.l.b16 %v667
    %v797 = vunpack.c.l.b16 %v668
    %v798 = vunpack.c.l.b16 %v669
    %v799 = vunpack.c.l.b16 %v670
    %v800 = vunpack.c.l.b16 %v671
    %v801 = vunpack.c.l.b16 %v672
    %v802 = vunpack.c.l.b16 %v673
    %v803 = vunpack.c.l.b16 %v674
    %v804 = vunpack.c.l.b16 %v675
    %v805 = vunpack.c.l.b16 %v676
    %v806 = vunpack.c.l.b16 %v677
    %v807 = vunpack.c.l.b16 %v678
    %v808 = vunpack.c.l.b16 %v679
    %v809 = vunpack.c.l.b16 %v680
    %v810 = vunpack.c.l.b16 %v681
    %v811 = vunpack.c.l.b16 %v682
    %v812 = vunpack.c.l.b16 %v683
    %v813 = vunpack.c.l.b16 %v684
    %v814 = vunpack.c.l.b16 %v685
    %v815 = vunpack.c.l.b16 %v686
    %v816 = vunpack.c.l.b16 %v687
    %v817 = vunpack.c.l.b16 %v688
    %v818 = vunpack.c.l.b16 %v689
    %v819 = vunpack.c.l.b16 %v690
    %v820 = vunpack.c.l.b16 %v691
    %v821 = vunpack.c.l.b16 %v692
    %v822 = vunpack.c.l.b16 %v693
    %v823 = vunpack.c.l.b16 %v694
    %v824 = vunpack.c.l.b16 %v695
    %v825 = vunpack.c.l.b16 %v696
    %v826 = vunpack.c.l.b16 %v697
    %v827 = vunpack.c.l.b16 %v698
    %v828 = vunpack.c.l.b16 %v699
    %v829 = vunpack.c.l.b16 %v700
    %v830 = vunpack.c.l.b16 %v701
    %v831 = vunpack.c.l.b16 %v702
    %v832 = vunpack.c.l.b16 %v703
    %v833 = vunpack.c.l.b16 %v704
    %v834 = vunpack.c.l.b16 %v705
    %v835 = vunpack.c.l.b16 %v706
    %v836 = vunpack.c.l.b16 %v707
    %v837 = vunpack.c.l.b16 %v708
    %v838 = vunpack.c.l.b16 %v709
    %v839 = vunpack.c.l.b16 %v710
    %v840 = vunpack.c.l.b16 %v711
    %v841 = vunpack.c.l.b16 %v712
    %v842 = vunpack.c.l.b16 %v713
    %v843 = vunpack.c.l.b16 %v714
    %v844 = vunpack.c.l.b16 %v715
    %v845 = vunpack.c.l.b16 %v716
    %v846 = vunpack.c.l.b16 %v717
    %v847 = vunpack.c.l.b16 %v718
    %v848 = vpack.c.b16 %v785, %v784
    %v849 = vpack.c.b16 %v787, %v786
    %v850 = vpack.c.b16 %v789, %v788
    %v851 = vpack.c.b16 %v791, %v790
    %v852 = vpack.c.b16 %v793, %v792
    %v853 = vpack.c.b16 %v795, %v794
    %v854 = vpack.c.b16 %v797, %v796
    %v855 = vpack.c.b16 %v799, %v798
    %v856 = vpack.c.b16 %v801, %v800
    %v857 = vpack.c.b16 %v803, %v802
    %v858 = vpack.c.b16 %v805, %v804
    %v859 = vpack.c.b16 %v807, %v806
    %v860 = vpack.c.b16 %v809, %v808
    %v861 = vpack.c.b16 %v811, %v810
    %v862 = vpack.c.b16 %v813, %v812
    %v863 = vpack.c.b16 %v815, %v814
    %v864 = vpack.c.b16 %v817, %v816
    %v865 = vpack.c.b16 %v819, %v818
    %v866 = vpack.c.b16 %v821, %v820
    %v867 = vpack.c.b16 %v823, %v822
    %v868 = vpack.c.b16 %v825, %v824
    %v869 = vpack.c.b16 %v827, %v826
    %v870 = vpack.c.b16 %v829, %v828
    %v871 = vpack.c.b16 %v831, %v830
    %v872 = vpack.c.b16 %v833, %v832
    %v873 = vpack.c.b16 %v835, %v834
    %v874 = vpack.c.b16 %v837, %v836
    %v875 = vpack.c.b16 %v839, %v838
    %v876 = vpack.c.b16 %v841, %v840
    %v877 = vpack.c.b16 %v843, %v842
    %v878 = vpack.c.b16 %v845, %v844
    %v879 = vpack.c.b16 %v847, %v846
    %912 = vmatpush.bf16.msra.mxu0 %v855
    %913 = vmatpush.bf16.msra.mxu0 %v854
    %914 = vmatpush.bf16.msra.mxu0 %v853
    %915 = vmatpush.bf16.msra.mxu0 %v852
    %916 = vmatpush.bf16.msra.mxu0 %v851
    %917 = vmatpush.bf16.msra.mxu0 %v850
    %918 = vmatpush.bf16.msra.mxu0 %v849
    %919 = vmatpush.bf16.msra.mxu0 %v848
    %920 = vmatmul.bf16.gmra.mxu0 %v651
    %v921 = vpop.f32.mrf.mxu0
    %v922 = vadd.f32 %v719, %v921
    %v923 = vpop.f32.mrf.mxu0
    %924 = vdwg.mxu0
    %925 = vmatpush.bf16.msra.mxu0 %v863
    %926 = vmatpush.bf16.msra.mxu0 %v862
    %927 = vmatpush.bf16.msra.mxu0 %v861
    %928 = vmatpush.bf16.msra.mxu0 %v860
    %929 = vmatpush.bf16.msra.mxu0 %v859
    %930 = vmatpush.bf16.msra.mxu0 %v858
    %931 = vmatpush.bf16.msra.mxu0 %v857
    %932 = vmatpush.bf16.msra.mxu0 %v856
    %933 = vmatmul.bf16.gmra.mxu0 %v652
    %v934 = vpop.f32.mrf.mxu0
    %v935 = vadd.f32 %v922, %v934
    %v936 = vpop.f32.mrf.mxu0
    %937 = vdwg.mxu0
    %938 = vmatpush.bf16.msra.mxu0 %v871
    %939 = vmatpush.bf16.msra.mxu0 %v870
    %940 = vmatpush.bf16.msra.mxu0 %v869
    %941 = vmatpush.bf16.msra.mxu0 %v868
    %942 = vmatpush.bf16.msra.mxu0 %v867
    %943 = vmatpush.bf16.msra.mxu0 %v866
    %944 = vmatpush.bf16.msra.mxu0 %v865
    %945 = vmatpush.bf16.msra.mxu0 %v864
    %946 = vmatmul.bf16.gmra.mxu0 %v653
    %v947 = vpop.f32.mrf.mxu0
    %v948 = vadd.f32 %v935, %v947
    %v949 = vpop.f32.mrf.mxu0
    %950 = vdwg.mxu0
    %951 = vmatpush.bf16.msra.mxu0 %v879
    %952 = vmatpush.bf16.msra.mxu0 %v878
    %953 = vmatpush.bf16.msra.mxu0 %v877
    %954 = vmatpush.bf16.msra.mxu0 %v876
    %955 = vmatpush.bf16.msra.mxu0 %v875
    %956 = vmatpush.bf16.msra.mxu0 %v874
    %957 = vmatpush.bf16.msra.mxu0 %v873
    %958 = vmatpush.bf16.msra.mxu0 %v872
    %959 = vmatmul.bf16.gmra.mxu0 %v654
    %v960 = vpop.f32.mrf.mxu0
    %v961 = vadd.f32 %v948, %v960
    %v962 = vpop.f32.mrf.mxu0
    %963 = vdwg.mxu0
    %v964 = vadd.f32 %v310, %v961
    %965 = vst [vmem:[%s7] sm:$0xf] %v964
    // Predicated region
    $region46: #{block_forward.1} parent=1 // pred_check
      _
    $region47: #{block_forward.1} parent=1 // pred_check_branch
      %967 = sbr.rel (0) target = $region49
    $region48: #{block_forward.1} parent=1 // pred_region
      _
    $region49: #{block_forward.1} parent=1 // pred_fallthru
      _
    // Predicated region
    $region50: #{block_forward.1} parent=1 // pred_check
      _
    $region51: #{block_forward.1} parent=1 // pred_check_branch
      %969 = sbr.rel (0) target = $region53
    $region52: #{block_forward.1} parent=1 // pred_region
      _
    $region53: #{block_forward.1} parent=1 // pred_fallthru
      _
    %970 = vsyncpa [#allocation3], 1
    %971 = vsyncpa [#allocation5], 1
    %972 = vsyncpa [#allocation8], 1

</llo_original>
